<compile_context>
chip_gen: v6e
topology: v6e:2x2x1
jax: 0.10.0
libtpu: 0.0.40
codegen_flags: <defaults>
</compile_context>

<pallas_src>
import functools

import jax
import jax.numpy as jnp
from jax import lax
from jax.experimental import pallas as pl
from jax.experimental.pallas import tpu as pltpu


# ---------------------------------------------------------------------------
# Helpers shared by the fused kernel and the two-pass fallback.
# ---------------------------------------------------------------------------

def _accumulate_tile(tile, si, *, ts, s_total, ragged, lane_acc):
    """Per-channel partial sums of one (C, TS) tile, in f32.

    lane_acc=True  -> returns (C, 128): VPU adds over static 128-lane slices
                      (keeps the per-tile hot path off the XLU).
    lane_acc=False -> returns (C, 1) via a lane reduce (only used for the
                      single-tile / lane-unaligned case).
    """
    if not lane_acc:
        return jnp.sum(tile.astype(jnp.float32), axis=-1, keepdims=True)
    part = None
    for k in range(ts // 128):
        sl = tile[:, k * 128:(k + 1) * 128].astype(jnp.float32)
        if ragged:
            lane = (si * ts + k * 128
                    + lax.broadcasted_iota(jnp.int32, sl.shape, 1))
            sl = jnp.where(lane < s_total, sl, 0.0)
        part = sl if part is None else part + sl
    return part


def _squeeze_excite(pooled, w1t, b1, w2, b2):
    """Tiny SE block on the VPU/XLU: pooled (C,1) -> sigmoid scale (C,1)."""
    h = jnp.sum(w1t * pooled, axis=0, keepdims=True) + b1      # (1, Cr)
    h = jnp.maximum(h, 0.0)
    z = jnp.sum(w2 * h, axis=1, keepdims=True) + b2            # (C, 1)
    return jax.nn.sigmoid(z)


def _apply_scale(tile, scale, out_dtype, *, f32_apply):
    if f32_apply:
        return (tile.astype(jnp.float32) * scale).astype(out_dtype)
    # bf16 inputs: multiply natively (v6e/v7x VPUs have bf16 ALUs).
    return (tile * scale.astype(tile.dtype)).astype(out_dtype)


# ---------------------------------------------------------------------------
# Fused kernel: pool -> SE -> apply with x cached in VMEM (1 HBM read of x).
# ---------------------------------------------------------------------------

def _fused_ca_kernel(x_ref, w1t_ref, b1_ref, w2_ref, b2_ref, o_ref,
                     cache_ref, acc_ref, scale_ref, *,
                     inv_s, ts, n_s, s_total, ragged, lane_acc, f32_apply):
    phase = pl.program_id(1)      # 0 = pool/cache, 1 = apply
    si = pl.program_id(2)

    @pl.when(phase == 0)
    def _pool_phase():
        tile = x_ref[0]                                  # (C, TS)
        if n_s == 1:
            cache_ref[...] = tile
        else:
            off = pl.multiple_of(si * ts, ts)
            cache_ref[:, pl.ds(off, ts)] = tile

        part = _accumulate_tile(tile, si, ts=ts, s_total=s_total,
                                ragged=ragged, lane_acc=lane_acc)

        @pl.when(si == 0)
        def _init():
            acc_ref[...] = part

        @pl.when(si > 0)
        def _accum():
            acc_ref[...] += part

        @pl.when(si == n_s - 1)
        def _finalize():
            pooled = jnp.sum(acc_ref[...], axis=-1, keepdims=True) * inv_s
            scale_ref[...] = _squeeze_excite(pooled, w1t_ref[...], b1_ref[...],
                                             w2_ref[...], b2_ref[...])

    @pl.when(phase == 1)
    def _apply_phase():
        if n_s == 1:
            tile = cache_ref[...]
        else:
            off = pl.multiple_of(si * ts, ts)
            tile = cache_ref[:, pl.ds(off, ts)]
        o_ref[0] = _apply_scale(tile, scale_ref[...], o_ref.dtype,
                                f32_apply=f32_apply)


# ---------------------------------------------------------------------------
# Two-pass fallback (image does not fit the VMEM budget): 2 reads + 1 write.
# ---------------------------------------------------------------------------

def _pool_se_kernel(x_ref, w1t_ref, b1_ref, w2_ref, b2_ref, scale_ref, acc_ref,
                    *, inv_s, ts, n_s, s_total, ragged, lane_acc):
    si = pl.program_id(1)
    part = _accumulate_tile(x_ref[0], si, ts=ts, s_total=s_total,
                            ragged=ragged, lane_acc=lane_acc)

    @pl.when(si == 0)
    def _init():
        acc_ref[...] = part

    @pl.when(si > 0)
    def _accum():
        acc_ref[...] += part

    @pl.when(si == n_s - 1)
    def _finalize():
        pooled = jnp.sum(acc_ref[...], axis=-1, keepdims=True) * inv_s
        scale_ref[0] = _squeeze_excite(pooled, w1t_ref[...], b1_ref[...],
                                       w2_ref[...], b2_ref[...])


def _apply_kernel(x_ref, scale_ref, o_ref, *, f32_apply):
    o_ref[0] = _apply_scale(x_ref[0], scale_ref[0], o_ref.dtype,
                            f32_apply=f32_apply)


# ---------------------------------------------------------------------------
# Wrapper.
# ---------------------------------------------------------------------------

def _vmem_budget_bytes():
    """~75% of physical VMEM: ~48 MiB on v7x, ~96 MiB on v5e/v6e."""
    try:
        phys = int(pltpu.get_tpu_info().vmem_capacity_bytes)
    except Exception:
        phys = 64 << 20          # conservative (v7x) fallback
    return max(16 << 20, (phys * 3) // 4)


def _pick_spatial_tile(S, C, itemsize, target_tile_bytes):
    """Spatial (lane) tile: multiple of 128 targeting ~target_tile_bytes."""
    LANE = 128
    max_lanes = max(LANE, (target_tile_bytes // (C * itemsize) // LANE) * LANE)
    if S <= max_lanes:
        return S, 1              # single tile covering the full spatial dim
    best = None
    for k in range(max_lanes // LANE, 0, -1):
        ts = k * LANE
        if S % ts == 0:          # prefer an exact divisor (no ragged mask)
            best = ts
            break
    if best is not None and best * 2 >= max_lanes:
        ts = best
    else:
        ts = max_lanes           # ragged last tile, masked in-kernel
    return ts, pl.cdiv(S, ts)


def ca_layer(x_nchw, w1, b1, w2, b2, *, target_tile_bytes=4 << 20,
             force_two_pass=False):
    """Channel attention layer (RCAN CALayer forward).

    x_nchw : (N, C, H, W)
    w1     : (C//r, C)  conv1 1x1 weight (squeezed)
    b1     : (C//r,)
    w2     : (C, C//r)  conv2 1x1 weight (squeezed)
    b2     : (C,)
    """
    N, C, H, W = x_nchw.shape
    Cr = w1.shape[0]
    S = H * W
    x = x_nchw.reshape(N, C, S)
    itemsize = jnp.dtype(x.dtype).itemsize

    TS, nS = _pick_spatial_tile(S, C, itemsize, target_tile_bytes)
    ragged = (S % TS) != 0
    lane_acc = (TS % 128) == 0
    acc_w = 128 if lane_acc else 1
    f32_apply = x.dtype != jnp.bfloat16

    w1t = jnp.transpose(w1)            # (C, Cr)
    b1_2d = b1.reshape(1, Cr)
    w2_2d = w2.reshape(C, Cr)
    b2_2d = b2.reshape(C, 1)

    tile_bytes = C * TS * itemsize
    weight_bytes = 2 * (2 * C * Cr + Cr + C) * 4
    small_scratch = 2 * C * 128 * 4
    budget = _vmem_budget_bytes()

    cache_bytes = C * nS * TS * itemsize
    # cache (single-buffered scratch) + 2x input tile + 2x output tile + misc.
    fused_need = (cache_bytes + 4 * tile_bytes + weight_bytes + small_scratch
                  + (4 << 20))
    use_fused = (not force_two_pass) and (fused_need <= budget)

    in_specs_weights = [
        pl.BlockSpec((C, Cr), lambda n, *_: (0, 0)),
        pl.BlockSpec((1, Cr), lambda n, *_: (0, 0)),
        pl.BlockSpec((C, Cr), lambda n, *_: (0, 0)),
        pl.BlockSpec((C, 1), lambda n, *_: (0, 0)),
    ]

    if use_fused:
        # x is fetched from HBM only during phase 0; phase 1 clamps the input
        # block index so no extra DMA happens while the cached copy is reused.
        out = pl.pallas_call(
            functools.partial(_fused_ca_kernel, inv_s=1.0 / float(S), ts=TS,
                              n_s=nS, s_total=S, ragged=ragged,
                              lane_acc=lane_acc, f32_apply=f32_apply),
            out_shape=jax.ShapeDtypeStruct((N, C, S), x.dtype),
            grid_spec=pltpu.PrefetchScalarGridSpec(
                num_scalar_prefetch=0,
                grid=(N, 2, nS),
                in_specs=[
                    pl.BlockSpec((1, C, TS),
                                 lambda n, p, s: (n, 0,
                                                  s * (1 - p) + (nS - 1) * p)),
                ] + in_specs_weights,
                out_specs=pl.BlockSpec((1, C, TS),
                                       lambda n, p, s: (n, 0, s * p)),
                scratch_shapes=[
                    pltpu.VMEM((C, nS * TS), x.dtype),    # cached image
                    pltpu.VMEM((C, acc_w), jnp.float32),  # pool accumulator
                    pltpu.VMEM((C, 1), jnp.float32),      # channel scale
                ],
            ),
            compiler_params=pltpu.CompilerParams(
                dimension_semantics=("parallel", "arbitrary", "arbitrary"),
                vmem_limit_bytes=int(min(budget,
                                         max(32 << 20, fused_need + (8 << 20)))),
            ),
        )(x, w1t, b1_2d, w2_2d, b2_2d)
        return out.reshape(N, C, H, W)

    # ---- Two-pass streaming fallback (large images / small VMEM budget) ----
    scale = pl.pallas_call(
        functools.partial(_pool_se_kernel, inv_s=1.0 / float(S), ts=TS, n_s=nS,
                          s_total=S, ragged=ragged, lane_acc=lane_acc),
        out_shape=jax.ShapeDtypeStruct((N, C, 1), jnp.float32),
        grid_spec=pltpu.PrefetchScalarGridSpec(
            num_scalar_prefetch=0,
            grid=(N, nS),
            in_specs=[pl.BlockSpec((1, C, TS), lambda n, s: (n, 0, s))]
                     + in_specs_weights,
            out_specs=pl.BlockSpec((1, C, 1), lambda n, s: (n, 0, 0)),
            scratch_shapes=[pltpu.VMEM((C, acc_w), jnp.float32)],
        ),
        compiler_params=pltpu.CompilerParams(
            dimension_semantics=("parallel", "arbitrary"),
            vmem_limit_bytes=int(min(budget,
                                     max(32 << 20,
                                         2 * tile_bytes + weight_bytes
                                         + small_scratch + (8 << 20)))),
        ),
    )(x, w1t, b1_2d, w2_2d, b2_2d)

    out = pl.pallas_call(
        functools.partial(_apply_kernel, f32_apply=f32_apply),
        out_shape=jax.ShapeDtypeStruct((N, C, S), x.dtype),
        grid_spec=pltpu.PrefetchScalarGridSpec(
            num_scalar_prefetch=0,
            grid=(N, nS),
            in_specs=[
                pl.BlockSpec((1, C, TS), lambda n, s: (n, 0, s)),
                pl.BlockSpec((1, C, 1), lambda n, s: (n, 0, 0)),
            ],
            out_specs=pl.BlockSpec((1, C, TS), lambda n, s: (n, 0, s)),
        ),
        compiler_params=pltpu.CompilerParams(
            dimension_semantics=("parallel", "parallel"),
            vmem_limit_bytes=int(min(budget,
                                     max(32 << 20, 4 * tile_bytes + (8 << 20)))),
        ),
    )(x, scale)
    return out.reshape(N, C, H, W)


# ---------------------------------------------------------------------------
# Pure-JAX reference and self-test.
# ---------------------------------------------------------------------------

def _reference(x, w1, b1, w2, b2):
    y = jnp.mean(x, axis=(2, 3), keepdims=True)                 # (N, C, 1, 1)
    y = jnp.einsum("rc,ncij->nrij", w1, y) + b1[None, :, None, None]
    y = jnp.maximum(y, 0.0)
    y = jnp.einsum("cr,nrij->ncij", w2, y) + b2[None, :, None, None]
    y = jax.nn.sigmoid(y)
    return x * y


if __name__ == "__main__":
    key = jax.random.PRNGKey(0)
    N, C, H, W = 2, 32, 16, 16
    reduction = 16
    Cr = C // reduction

    k_x, k_w1, k_b1, k_w2, k_b2 = jax.random.split(key, 5)
    x = jax.random.normal(k_x, (N, C, H, W), dtype=jnp.float32)

    w1 = jax.random.normal(k_w1, (Cr, C), dtype=jnp.float32) * 0.1
    b1 = jax.random.normal(k_b1, (Cr,), dtype=jnp.float32) * 0.1
    w2 = jax.random.normal(k_w2, (C, Cr), dtype=jnp.float32) * 0.1
    b2 = jax.random.normal(k_b2, (C,), dtype=jnp.float32) * 0.1

    ref = _reference(x, w1, b1, w2, b2)

    # Fused single-read kernel, single spatial tile (default tiling).
    out = jax.block_until_ready(ca_layer(x, w1, b1, w2, b2))
    assert out.shape == (N, C, H, W)
    assert jnp.allclose(out, ref, atol=1e-5, rtol=1e-5), "mismatch (fused)"

    # Fused kernel, multi-tile streamed pooling + VMEM-cached apply.
    out2 = jax.block_until_ready(
        ca_layer(x, w1, b1, w2, b2, target_tile_bytes=C * 128 * 4))
    assert jnp.allclose(out2, ref, atol=1e-5, rtol=1e-5), "mismatch (fused tiled)"

    # Two-pass streaming fallback path (used when an image exceeds the VMEM budget).
    out3 = jax.block_until_ready(
        ca_layer(x, w1, b1, w2, b2, target_tile_bytes=C * 128 * 4,
                 force_two_pass=True))
    assert jnp.allclose(out3, ref, atol=1e-5, rtol=1e-5), "mismatch (two-pass)"

    # Ragged spatial size: in-kernel lane masking, no wrapper-side pad pass.
    xr = jax.random.normal(k_x, (N, C, 12, 12), dtype=jnp.float32)   # S = 144
    refr = _reference(xr, w1, b1, w2, b2)
    outr = jax.block_until_ready(
        ca_layer(xr, w1, b1, w2, b2, target_tile_bytes=C * 128 * 4))
    assert jnp.allclose(outr, refr, atol=1e-5, rtol=1e-5), "mismatch (ragged)"

    print("KERNEL_OK")
</pallas_src>

<mosaic_0001>
module attributes {stable_mosaic.version = 11 : i64} {
  func.func @_fused_ca_kernel(%arg0: i32, %arg1: i32, %arg2: i32, %arg3: memref<1x32x256xf32, #tpu.memory_space<vmem>>, %arg4: memref<32x2xf32, #tpu.memory_space<vmem>>, %arg5: memref<1x2xf32, #tpu.memory_space<vmem>>, %arg6: memref<32x2xf32, #tpu.memory_space<vmem>>, %arg7: memref<32x1xf32, #tpu.memory_space<vmem>>, %arg8: memref<1x32x256xf32, #tpu.memory_space<vmem>>, %arg9: memref<32x256xf32, #tpu.memory_space<vmem>>, %arg10: memref<32x128xf32, #tpu.memory_space<vmem>>, %arg11: memref<32x1xf32, #tpu.memory_space<vmem>>) attributes {dimension_semantics = [#tpu.dimension_semantics<parallel>, #tpu.dimension_semantics<arbitrary>, #tpu.dimension_semantics<arbitrary>], iteration_bounds = array<i64: 2, 2, 1>, scalar_prefetch = 0 : i64, scratch_operands = 3 : i64, tpu.core_type = #tpu.core_type<tc>, window_params = [{transform_indices = @transform_0, window_bounds = array<i64: 1, 32, 256>}, {pipeline_mode = #tpu.pipeline_mode<synchronous>, transform_indices = @transform_1, window_bounds = array<i64: 32, 2>}, {pipeline_mode = #tpu.pipeline_mode<synchronous>, transform_indices = @transform_2, window_bounds = array<i64: 1, 2>}, {pipeline_mode = #tpu.pipeline_mode<synchronous>, transform_indices = @transform_3, window_bounds = array<i64: 32, 2>}, {pipeline_mode = #tpu.pipeline_mode<synchronous>, transform_indices = @transform_4, window_bounds = array<i64: 32, 1>}, {transform_indices = @transform_5, window_bounds = array<i64: 1, 32, 256>}]} {
    %c0_i32 = arith.constant 0 : i32
    %0 = arith.cmpi eq, %arg1, %c0_i32 : i32
    %1 = arith.extui %0 : i1 to i32
    %c0_i32_0 = arith.constant 0 : i32
    %2 = arith.cmpi ne, %1, %c0_i32_0 : i32
    scf.if %2 {
      %c0 = arith.constant 0 : index
      %c0_2 = arith.constant 0 : index
      %c0_3 = arith.constant 0 : index
      %6 = vector.load %arg3[%c0, %c0_2, %c0_3] : memref<1x32x256xf32, #tpu.memory_space<vmem>>, vector<1x32x256xf32>
      %7 = vector.shape_cast %6 : vector<1x32x256xf32> to vector<32x256xf32>
      %c0_4 = arith.constant 0 : index
      %c0_5 = arith.constant 0 : index
      %8 = vector.load %arg9[%c0_4, %c0_5] : memref<32x256xf32, #tpu.memory_space<vmem>>, vector<32x256xf32>
      tpu.vector_store %arg9[%c0_4, %c0_5], %7 {strides = array<i32>} : memref<32x256xf32, #tpu.memory_space<vmem>>, vector<32x256xf32>,
      %9 = vector.extract_strided_slice %7 {offsets = [0, 0], sizes = [32, 128], strides = [1, 1]} : vector<32x256xf32> to vector<32x128xf32>
      %10 = vector.extract_strided_slice %7 {offsets = [0, 128], sizes = [32, 128], strides = [1, 1]} : vector<32x256xf32> to vector<32x128xf32>
      %11 = arith.addf %9, %10 : vector<32x128xf32>
      %c0_i32_6 = arith.constant 0 : i32
      %12 = arith.cmpi eq, %arg2, %c0_i32_6 : i32
      %13 = arith.extui %12 : i1 to i32
      %c0_i32_7 = arith.constant 0 : i32
      %14 = arith.cmpi ne, %13, %c0_i32_7 : i32
      scf.if %14 {
        %c0_12 = arith.constant 0 : index
        %c0_13 = arith.constant 0 : index
        %21 = vector.load %arg10[%c0_12, %c0_13] : memref<32x128xf32, #tpu.memory_space<vmem>>, vector<32x128xf32>
        tpu.vector_store %arg10[%c0_12, %c0_13], %11 {strides = array<i32>} : memref<32x128xf32, #tpu.memory_space<vmem>>, vector<32x128xf32>,
      } else {
      }
      %c0_i32_8 = arith.constant 0 : i32
      %15 = arith.cmpi sgt, %arg2, %c0_i32_8 : i32
      %16 = arith.extui %15 : i1 to i32
      %c0_i32_9 = arith.constant 0 : i32
      %17 = arith.cmpi ne, %16, %c0_i32_9 : i32
      scf.if %17 {
        %c0_12 = arith.constant 0 : index
        %c0_13 = arith.constant 0 : index
        %21 = vector.load %arg10[%c0_12, %c0_13] : memref<32x128xf32, #tpu.memory_space<vmem>>, vector<32x128xf32>
        %22 = arith.addf %21, %11 : vector<32x128xf32>
        %c0_14 = arith.constant 0 : index
        %c0_15 = arith.constant 0 : index
        %23 = vector.load %arg10[%c0_14, %c0_15] : memref<32x128xf32, #tpu.memory_space<vmem>>, vector<32x128xf32>
        tpu.vector_store %arg10[%c0_14, %c0_15], %22 {strides = array<i32>} : memref<32x128xf32, #tpu.memory_space<vmem>>, vector<32x128xf32>,
      } else {
      }
      %c0_i32_10 = arith.constant 0 : i32
      %18 = arith.cmpi eq, %arg2, %c0_i32_10 : i32
      %19 = arith.extui %18 : i1 to i32
      %c0_i32_11 = arith.constant 0 : i32
      %20 = arith.cmpi ne, %19, %c0_i32_11 : i32
      scf.if %20 {
        %c0_12 = arith.constant 0 : index
        %c0_13 = arith.constant 0 : index
        %21 = vector.load %arg10[%c0_12, %c0_13] : memref<32x128xf32, #tpu.memory_space<vmem>>, vector<32x128xf32>
        %cst = arith.constant dense<0.000000e+00> : vector<32xf32>
        %22 = vector.multi_reduction <add>, %21, %cst [1] : vector<32x128xf32> to vector<32xf32>
        %23 = vector.shape_cast %22 : vector<32xf32> to vector<32x1xf32>
        %cst_14 = arith.constant 3.906250e-03 : f32
        %24 = vector.broadcast %cst_14 : f32 to vector<32x1xf32>
        %25 = arith.mulf %23, %24 : vector<32x1xf32>
        %c0_15 = arith.constant 0 : index
        %c0_16 = arith.constant 0 : index
        %26 = vector.load %arg4[%c0_15, %c0_16] : memref<32x2xf32, #tpu.memory_space<vmem>>, vector<32x2xf32>
        %c0_17 = arith.constant 0 : index
        %c0_18 = arith.constant 0 : index
        %27 = vector.load %arg5[%c0_17, %c0_18] : memref<1x2xf32, #tpu.memory_space<vmem>>, vector<1x2xf32>
        %c0_19 = arith.constant 0 : index
        %c0_20 = arith.constant 0 : index
        %28 = vector.load %arg6[%c0_19, %c0_20] : memref<32x2xf32, #tpu.memory_space<vmem>>, vector<32x2xf32>
        %c0_21 = arith.constant 0 : index
        %c0_22 = arith.constant 0 : index
        %29 = vector.load %arg7[%c0_21, %c0_22] : memref<32x1xf32, #tpu.memory_space<vmem>>, vector<32x1xf32>
        %30 = vector.broadcast %25 : vector<32x1xf32> to vector<32x2xf32>
        %31 = arith.mulf %26, %30 : vector<32x2xf32>
        %cst_23 = arith.constant dense<0.000000e+00> : vector<2xf32>
        %32 = vector.multi_reduction <add>, %31, %cst_23 [0] : vector<32x2xf32> to vector<2xf32>
        %33 = vector.shape_cast %32 : vector<2xf32> to vector<1x2xf32>
        %34 = arith.addf %33, %27 : vector<1x2xf32>
        %cst_24 = arith.constant 0.000000e+00 : f32
        %35 = vector.broadcast %cst_24 : f32 to vector<1x2xf32>
        %36 = arith.maximumf %34, %35 : vector<1x2xf32>
        %37 = vector.broadcast %36 : vector<1x2xf32> to vector<32x2xf32>
        %38 = arith.mulf %28, %37 : vector<32x2xf32>
        %cst_25 = arith.constant dense<0.000000e+00> : vector<32xf32>
        %39 = vector.multi_reduction <add>, %38, %cst_25 [1] : vector<32x2xf32> to vector<32xf32>
        %40 = vector.shape_cast %39 : vector<32xf32> to vector<32x1xf32>
        %41 = arith.addf %40, %29 : vector<32x1xf32>
        %42 = arith.negf %41 : vector<32x1xf32>
        %43 = math.exp %42 : vector<32x1xf32>
        %cst_26 = arith.constant 1.000000e+00 : f32
        %44 = vector.broadcast %cst_26 : f32 to vector<32x1xf32>
        %45 = arith.addf %44, %43 : vector<32x1xf32>
        %46 = arith.divf %44, %45 : vector<32x1xf32>
        %c0_27 = arith.constant 0 : index
        %c0_28 = arith.constant 0 : index
        %47 = vector.load %arg11[%c0_27, %c0_28] : memref<32x1xf32, #tpu.memory_space<vmem>>, vector<32x1xf32>
        tpu.vector_store %arg11[%c0_27, %c0_28], %46 {strides = array<i32>} : memref<32x1xf32, #tpu.memory_space<vmem>>, vector<32x1xf32>,
      } else {
      }
    } else {
    }
    %c1_i32 = arith.constant 1 : i32
    %3 = arith.cmpi eq, %arg1, %c1_i32 : i32
    %4 = arith.extui %3 : i1 to i32
    %c0_i32_1 = arith.constant 0 : i32
    %5 = arith.cmpi ne, %4, %c0_i32_1 : i32
    scf.if %5 {
      %c0 = arith.constant 0 : index
      %c0_2 = arith.constant 0 : index
      %6 = vector.load %arg9[%c0, %c0_2] : memref<32x256xf32, #tpu.memory_space<vmem>>, vector<32x256xf32>
      %c0_3 = arith.constant 0 : index
      %c0_4 = arith.constant 0 : index
      %7 = vector.load %arg11[%c0_3, %c0_4] : memref<32x1xf32, #tpu.memory_space<vmem>>, vector<32x1xf32>
      %8 = vector.broadcast %7 : vector<32x1xf32> to vector<32x256xf32>
      %9 = arith.mulf %6, %8 : vector<32x256xf32>
      %c0_5 = arith.constant 0 : index
      %c0_6 = arith.constant 0 : index
      %c0_7 = arith.constant 0 : index
      %10 = vector.load %arg8[%c0_5, %c0_6, %c0_7] : memref<1x32x256xf32, #tpu.memory_space<vmem>>, vector<1x32x256xf32>
      %11 = vector.shape_cast %10 : vector<1x32x256xf32> to vector<32x256xf32>
      %12 = vector.shape_cast %9 : vector<32x256xf32> to vector<1x32x256xf32>
      tpu.vector_store %arg8[%c0_5, %c0_6, %c0_7], %12 {strides = array<i32>} : memref<1x32x256xf32, #tpu.memory_space<vmem>>, vector<1x32x256xf32>,
    } else {
    }
    return
  }
  func.func @transform_0(%arg0: i32, %arg1: i32, %arg2: i32) -> (i32, i32, i32) {
    %c1_i32 = arith.constant 1 : i32
    %0 = arith.subi %c1_i32, %arg1 : i32
    %1 = arith.muli %arg2, %0 : i32
    %c0_i32 = arith.constant 0 : i32
    %2 = arith.muli %c0_i32, %arg1 : i32
    %3 = arith.addi %1, %2 : i32
    %c0_i32_0 = arith.constant 0 : i32
    %c0_i32_1 = arith.constant 0 : i32
    return %arg0, %c0_i32_0, %3 : i32, i32, i32
  }
  func.func @transform_1(%arg0: i32, %arg1: i32, %arg2: i32) -> (i32, i32) {
    %c0_i32 = arith.constant 0 : i32
    %c0_i32_0 = arith.constant 0 : i32
    %c0_i32_1 = arith.constant 0 : i32
    return %c0_i32, %c0_i32_0 : i32, i32
  }
  func.func @transform_2(%arg0: i32, %arg1: i32, %arg2: i32) -> (i32, i32) {
    %c0_i32 = arith.constant 0 : i32
    %c0_i32_0 = arith.constant 0 : i32
    %c0_i32_1 = arith.constant 0 : i32
    return %c0_i32, %c0_i32_0 : i32, i32
  }
  func.func @transform_3(%arg0: i32, %arg1: i32, %arg2: i32) -> (i32, i32) {
    %c0_i32 = arith.constant 0 : i32
    %c0_i32_0 = arith.constant 0 : i32
    %c0_i32_1 = arith.constant 0 : i32
    return %c0_i32, %c0_i32_0 : i32, i32
  }
  func.func @transform_4(%arg0: i32, %arg1: i32, %arg2: i32) -> (i32, i32) {
    %c0_i32 = arith.constant 0 : i32
    %c0_i32_0 = arith.constant 0 : i32
    %c0_i32_1 = arith.constant 0 : i32
    return %c0_i32, %c0_i32_0 : i32, i32
  }
  func.func @transform_5(%arg0: i32, %arg1: i32, %arg2: i32) -> (i32, i32, i32) {
    %0 = arith.muli %arg2, %arg1 : i32
    %c0_i32 = arith.constant 0 : i32
    %c0_i32_0 = arith.constant 0 : i32
    return %arg0, %c0_i32, %0 : i32, i32, i32
  }
}

</mosaic_0001>

<llo_original>
// kernel: tpu_custom_call.1
$region0: #{tpu_custom_call.1}
  #allocation0 [shape = 'u32[]', space=smem, size = 0x4, offset = 0x4, fixed_abs, tag = 'smem constant byte address 0x4 - core index']
  #allocation1 [shape = 'u32[144,128]{1,0:T(1,128)}', space=vmem, size = 0x12000, scoped, tag = 'internal scratch']
  #allocation2 [shape = 'f32[32,256]{1,0:T(8,128)}', space=vmem, size = 0x8000, scoped, tag = 'scratch operand']
  #allocation3 [shape = 'f32[32,128]{1,0:T(8,128)}', space=vmem, size = 0x4000, scoped, tag = 'scratch operand']
  #allocation4 [shape = 'f32[32,1]{1,0:T(8,128)}', space=vmem, size = 0x4000, scoped, tag = 'scratch operand']
  %s0 = inlined_call_operand.hbm [shape: f32[2,32,256], index: 0, kind: input, shape index: {}]
  %s1 = inlined_call_operand.vmem [shape: f32[32,2], index: 1, kind: input, shape index: {}]
  %s2 = inlined_call_operand.vmem [shape: f32[1,2], index: 2, kind: input, shape index: {}]
  %s3 = inlined_call_operand.vmem [shape: f32[32,2], index: 3, kind: input, shape index: {}]
  %s4 = inlined_call_operand.vmem [shape: f32[32,1], index: 4, kind: input, shape index: {}]
  %s5 = inlined_call_operand.hbm [shape: f32[2,32,256], index: 5, kind: output, shape index: {}]
  %s6 = sld [smem:[#allocation0]]
  $region77: #{tpu_custom_call.1} parent=0
    _
  %s8 = ssub.s32 1, %s6
  %s9 = scalar_select 0, %s8, %s6
  $region1: #{tpu_custom_call.1} parent=0
    #allocation5 [shape = 'u8[65536]{0}', space=vmem, size = 0x10000, scoped, tag = 'input window, operand 0']
    #allocation6 [shape = 's32[2]{0}', space=sflag, size = 0x8, scoped, tag = 'scoped memory for tpu_custom_call.1']
    #allocation7 [shape = 's32[2]{0}', space=sflag, size = 0x8, scoped, tag = 'scoped memory for tpu_custom_call.1']
    #allocation8 [shape = 'u8[65536]{0}', space=vmem, size = 0x10000, scoped, tag = 'output window, operand 0']
    %10 = vsyncpa [#allocation6], 0
    %s11 = scalar_lea.sflag [#allocation6], 1
    %12 = vsyncpa %s11, 0
    %13 = vsyncpa [#allocation7], 0
    %s14 = scalar_lea.sflag [#allocation7], 1
    %15 = vsyncpa %s14, 0
    loop: start=0, step=1, limit=6
    $region2: #{tpu_custom_call.1} parent=1 // loop_pre_header
      _
    $region3: #{tpu_custom_call.1} parent=1 // loop_header
      %s17 = sphi 0, %s21
      %p18 = scmp.ge.s32.totalorder %s17, 6
      %s24 = sphi 0, %s43
      %s25 = sphi 0, %s39
      %s26 = sphi 0, %s35
      %s27 = sphi 0, %s24
      %s28 = sphi 0, %s25
      %s29 = sphi 0, %s26
      %s30 = sphi 0, %s27
      %s31 = sphi 0, %s28
      %s32 = sphi 0, %s29
      %s52 = sphi 0, %s54
      %s55 = sphi 0, %s52
      %s56 = sphi 0, %s55
      %s72 = sphi 0, %s56
      %s76 = sphi 0, %s76
      %s78 = sphi 0, %s76
      %s79 = sphi 0, %s78
      %s93 = sphi 0, %s79
      %s97 = sphi 0, %s97
      %s99 = sphi 0, %s97
      %s100 = sphi 0, %s99
      %s114 = sphi 0, %s100
      %s118 = sphi 0, %s118
      %s120 = sphi 0, %s118
      %s121 = sphi 0, %s120
      %s135 = sphi 0, %s121
      %s139 = sphi 0, %s139
      %s141 = sphi 0, %s139
      %s142 = sphi 0, %s141
      %s156 = sphi 0, %s142
      %s166 = sphi 0, %s168
      %s169 = sphi 0, %s166
      %s170 = sphi 0, %s169
      %s186 = sphi 0, %s170
    $region4: #{tpu_custom_call.1} parent=1 // loop_header_branch
      %20 = sbr.rel (%p18) target = $region8
    $region5: #{tpu_custom_call.1} parent=1 // loop_body
      %s22 = ssub.s32 %s17, 1
      %s23 = ssub.s32 %s17, 2
      %s33 = sadd.s32 1, %s26
      %p34 = scmp.ge.s32.totalorder %s33, 1
      %s35 = scalar_select %p34, 0, %s33
      %s36 = sadd.s32 1, %s25
      %s37 = scalar_select %p34, %s36, %s25
      %p38 = scmp.ge.s32.totalorder %s37, 2
      %s39 = scalar_select %p38, 0, %s37
      %s40 = sadd.s32 1, %s24
      %s41 = scalar_select %p38, %s40, %s24
      %p42 = scmp.ge.s32.totalorder %s41, 2
      %s43 = scalar_select %p42, 0, %s41
      %s44 = ssub.s32 1, %s25
      %s45 = smul.u32 %s26, %s44
      %s46 = ssub.s32 1, %s39
      %s47 = smul.u32 %s35, %s46
      %s48 = ssub.s32 %s24, %s43
      %s49 = ssub.s32 %s45, %s47
      %s50 = sor.u32 %s48, %s49
      %p51 = scmp.eq.s32.totalorder %s50, 0
      %s53 = sadd.s32 %s52, 1
      %s54 = scalar_select %p51, %s52, %s53
      %p57 = pneg %p51
      %p58 = scmp.eq.s32.totalorder %s17, 3
      %p59 = por %p57, %p58
      %p60 = scmp.ne.s32.totalorder %s52, %s55
      %p61 = scmp.eq.s32.totalorder %s17, 0
      %p62 = por %p60, %p61
      %p63 = scmp.ne.s32.totalorder %s52, %s55
      %p64 = scmp.eq.s32.totalorder %s22, 3
      %p65 = por %p63, %p64
      %p66 = scmp.ne.s32.totalorder %s55, %s56
      %p67 = scmp.eq.s32.totalorder %s22, 0
      %p68 = por %p66, %p67
      %p69 = scmp.ne.s32.totalorder %s55, %s56
      %p70 = scmp.eq.s32.totalorder %s23, 3
      %p71 = por %p69, %p70
      %p73 = scmp.ne.s32.totalorder %s56, %s72
      %p74 = scmp.eq.s32.totalorder %s23, 0
      %p75 = por %p73, %p74
      %s77 = sadd.s32 %s76, 1
      %p80 = scmp.eq.s32.totalorder %s17, 3
      %p81 = scmp.ne.s32.totalorder %s76, %s78
      %p82 = scmp.eq.s32.totalorder %s17, 0
      %p83 = por %p81, %p82
      %p84 = scmp.ne.s32.totalorder %s76, %s78
      %p85 = scmp.eq.s32.totalorder %s22, 3
      %p86 = por %p84, %p85
      %p87 = scmp.ne.s32.totalorder %s78, %s79
      %p88 = scmp.eq.s32.totalorder %s22, 0
      %p89 = por %p87, %p88
      %p90 = scmp.ne.s32.totalorder %s78, %s79
      %p91 = scmp.eq.s32.totalorder %s23, 3
      %p92 = por %p90, %p91
      %p94 = scmp.ne.s32.totalorder %s79, %s93
      %p95 = scmp.eq.s32.totalorder %s23, 0
      %p96 = por %p94, %p95
      %s98 = sadd.s32 %s97, 1
      %p101 = scmp.eq.s32.totalorder %s17, 3
      %p102 = scmp.ne.s32.totalorder %s97, %s99
      %p103 = scmp.eq.s32.totalorder %s17, 0
      %p104 = por %p102, %p103
      %p105 = scmp.ne.s32.totalorder %s97, %s99
      %p106 = scmp.eq.s32.totalorder %s22, 3
      %p107 = por %p105, %p106
      %p108 = scmp.ne.s32.totalorder %s99, %s100
      %p109 = scmp.eq.s32.totalorder %s22, 0
      %p110 = por %p108, %p109
      %p111 = scmp.ne.s32.totalorder %s99, %s100
      %p112 = scmp.eq.s32.totalorder %s23, 3
      %p113 = por %p111, %p112
      %p115 = scmp.ne.s32.totalorder %s100, %s114
      %p116 = scmp.eq.s32.totalorder %s23, 0
      %p117 = por %p115, %p116
      %s119 = sadd.s32 %s118, 1
      %p122 = scmp.eq.s32.totalorder %s17, 3
      %p123 = scmp.ne.s32.totalorder %s118, %s120
      %p124 = scmp.eq.s32.totalorder %s17, 0
      %p125 = por %p123, %p124
      %p126 = scmp.ne.s32.totalorder %s118, %s120
      %p127 = scmp.eq.s32.totalorder %s22, 3
      %p128 = por %p126, %p127
      %p129 = scmp.ne.s32.totalorder %s120, %s121
      %p130 = scmp.eq.s32.totalorder %s22, 0
      %p131 = por %p129, %p130
      %p132 = scmp.ne.s32.totalorder %s120, %s121
      %p133 = scmp.eq.s32.totalorder %s23, 3
      %p134 = por %p132, %p133
      %p136 = scmp.ne.s32.totalorder %s121, %s135
      %p137 = scmp.eq.s32.totalorder %s23, 0
      %p138 = por %p136, %p137
      %s140 = sadd.s32 %s139, 1
      %p143 = scmp.eq.s32.totalorder %s17, 3
      %p144 = scmp.ne.s32.totalorder %s139, %s141
      %p145 = scmp.eq.s32.totalorder %s17, 0
      %p146 = por %p144, %p145
      %p147 = scmp.ne.s32.totalorder %s139, %s141
      %p148 = scmp.eq.s32.totalorder %s22, 3
      %p149 = por %p147, %p148
      %p150 = scmp.ne.s32.totalorder %s141, %s142
      %p151 = scmp.eq.s32.totalorder %s22, 0
      %p152 = por %p150, %p151
      %p153 = scmp.ne.s32.totalorder %s141, %s142
      %p154 = scmp.eq.s32.totalorder %s23, 3
      %p155 = por %p153, %p154
      %p157 = scmp.ne.s32.totalorder %s142, %s156
      %p158 = scmp.eq.s32.totalorder %s23, 0
      %p159 = por %p157, %p158
      %s160 = smul.u32 %s26, %s25
      %s161 = smul.u32 %s35, %s39
      %s162 = ssub.s32 %s24, %s43
      %s163 = ssub.s32 %s160, %s161
      %s164 = sor.u32 %s162, %s163
      %p165 = scmp.eq.s32.totalorder %s164, 0
      %s167 = sadd.s32 %s166, 1
      %s168 = scalar_select %p165, %s166, %s167
      %p171 = pneg %p165
      %p172 = scmp.eq.s32.totalorder %s17, 3
      %p173 = por %p171, %p172
      %p174 = scmp.ne.s32.totalorder %s166, %s169
      %p175 = scmp.eq.s32.totalorder %s17, 0
      %p176 = por %p174, %p175
      %p177 = scmp.ne.s32.totalorder %s166, %s169
      %p178 = scmp.eq.s32.totalorder %s22, 3
      %p179 = por %p177, %p178
      %p180 = scmp.ne.s32.totalorder %s169, %s170
      %p181 = scmp.eq.s32.totalorder %s22, 0
      %p182 = por %p180, %p181
      %p183 = scmp.ne.s32.totalorder %s169, %s170
      %p184 = scmp.eq.s32.totalorder %s23, 3
      %p185 = por %p183, %p184
      %p187 = scmp.ne.s32.totalorder %s170, %s186
      %p188 = scmp.eq.s32.totalorder %s23, 0
      %p189 = por %p187, %p188
      %p190 = scmp.le.s32.totalorder 1, %s17
      %p191 = scmp.lt.s32.totalorder %s17, 5
      %p192 = pnand %p190, %p191
      %p193 = pneg %p192
      // Predicated region
      $region9: #{tpu_custom_call.1} parent=5 // pred_check
        _
      $region10: #{tpu_custom_call.1} parent=5 // pred_check_branch
        %195 = sbr.rel (%p192) target = $region12
      $region11: #{tpu_custom_call.1} parent=5 // pred_region
        %s196 = ssub.s32 %s17, 1
        // Predicated region
        $region13: #{tpu_custom_call.1} parent=11 // pred_check
          %p197 = pneg %p89
        $region14: #{tpu_custom_call.1} parent=11 // pred_check_branch
          %199 = sbr.rel (%p197) target = $region16
        $region15: #{tpu_custom_call.1} parent=11 // pred_region
          _
        $region16: #{tpu_custom_call.1} parent=11 // pred_fallthru
          _
        // Predicated region
        $region17: #{tpu_custom_call.1} parent=11 // pred_check
          %p200 = pneg %p110
        $region18: #{tpu_custom_call.1} parent=11 // pred_check_branch
          %202 = sbr.rel (%p200) target = $region20
        $region19: #{tpu_custom_call.1} parent=11 // pred_region
          _
        $region20: #{tpu_custom_call.1} parent=11 // pred_fallthru
          _
        // Predicated region
        $region21: #{tpu_custom_call.1} parent=11 // pred_check
          %p203 = pneg %p131
        $region22: #{tpu_custom_call.1} parent=11 // pred_check_branch
          %205 = sbr.rel (%p203) target = $region24
        $region23: #{tpu_custom_call.1} parent=11 // pred_region
          _
        $region24: #{tpu_custom_call.1} parent=11 // pred_fallthru
          _
        // Predicated region
        $region25: #{tpu_custom_call.1} parent=11 // pred_check
          %p206 = pneg %p152
        $region26: #{tpu_custom_call.1} parent=11 // pred_check_branch
          %208 = sbr.rel (%p206) target = $region28
        $region27: #{tpu_custom_call.1} parent=11 // pred_region
          _
        $region28: #{tpu_custom_call.1} parent=11 // pred_fallthru
          _
      $region12: #{tpu_custom_call.1} parent=5 // pred_fallthru
        _
      %p209 = scmp.lt.s32.totalorder %s17, 4
      // Predicated region
      $region29: #{tpu_custom_call.1} parent=5 // pred_check
        %p210 = pneg %p209
      $region30: #{tpu_custom_call.1} parent=5 // pred_check_branch
        %212 = sbr.rel (%p210) target = $region32
      $region31: #{tpu_custom_call.1} parent=5 // pred_region
        // Predicated region
        $region33: #{tpu_custom_call.1} parent=31 // pred_check
          %p213 = pneg %p62
        $region34: #{tpu_custom_call.1} parent=31 // pred_check_branch
          %215 = sbr.rel (%p213) target = $region36
        $region35: #{tpu_custom_call.1} parent=31 // pred_region
          %s216 = sand.u32 %s52, 1
          %s217 = scalar_lea.sflag [#allocation6], %s216
          %s218 = sand.u32 %s52, 1
          %s219 = smul.addr %s218, 64
          %s220 = scalar_lea.vmem [#allocation5], %s219
          %s221 = ssub.s32 1, %s25
          %s222 = smul.u32 %s26, %s221
          %s223 = smul.u32 2, %s222
          %s225 = ssub.s32 1024, 1024
          %226 = vsyncadd %s217, %s225
          %s227 = smul.addr %s24, 8
          %s228 = sadd.s32 %s223, %s227
          %s229 = smul.addr %s228, 128
          %s230 = scalar_lea.hbm %s0, %s229
          %s231 = sshll.u32 %s220, 4
          %s232 = int_to_ptr.vmem [resolvable:$true] %s231
          %237 = dma.hbm_to_vmem [thread:$0]  %s230, 1024, %s232, %s217, 256, 256, 16
        $region36: #{tpu_custom_call.1} parent=31 // pred_fallthru
          _
      $region32: #{tpu_custom_call.1} parent=5 // pred_fallthru
        _
      %p238 = scmp.le.s32.totalorder 1, %s17
      %p239 = scmp.lt.s32.totalorder %s17, 5
      %p240 = pnand %p238, %p239
      %p241 = pneg %p240
      // Predicated region
      $region37: #{tpu_custom_call.1} parent=5 // pred_check
        _
      $region38: #{tpu_custom_call.1} parent=5 // pred_check_branch
        %243 = sbr.rel (%p240) target = $region40
      $region39: #{tpu_custom_call.1} parent=5 // pred_region
        %s244 = ssub.s32 %s17, 1
        %s245 = sand.u32 %s55, 1
        %s246 = scalar_lea.sflag [#allocation6], %s245
        %s247 = sand.u32 %s55, 1
        %s248 = smul.addr %s247, 64
        %s249 = scalar_lea.vmem [#allocation5], %s248
        // Predicated region
        $region41: #{tpu_custom_call.1} parent=39 // pred_check
          %p250 = pneg %p68
        $region42: #{tpu_custom_call.1} parent=39 // pred_check_branch
          %252 = sbr.rel (%p250) target = $region44
        $region43: #{tpu_custom_call.1} parent=39 // pred_region
          %253 = dma.done %s246, 1024
        $region44: #{tpu_custom_call.1} parent=39 // pred_fallthru
          _
        %s254 = sand.u32 %s55, 1
        %s255 = scalar_lea.sflag [#allocation6], %s254
        %s256 = sand.u32 %s55, 1
        %s257 = smul.addr %s256, 64
        %s258 = scalar_lea.vmem [#allocation5], %s257
        %p259 = pneg %p68
        %p260 = pneg %p65
        %p261 = pneg %p89
        %p262 = pneg %p86
        %p263 = pneg %p110
        %p264 = pneg %p107
        %p265 = pneg %p131
        %p266 = pneg %p128
        %p267 = pneg %p152
        %p268 = pneg %p149
        %p269 = pneg %p182
        %p270 = pneg %p179
        %s271 = sand.u32 %s169, 1
        %s272 = scalar_lea.sflag [#allocation7], %s271
        %s273 = sand.u32 %s169, 1
        %s274 = smul.addr %s273, 64
        %s275 = scalar_lea.vmem [#allocation8], %s274
        %s276 = ssub.s32 1, %s28
        %s277 = smul.u32 %s29, %s276
        %s278 = smul.u32 2, %s277
        %s279 = smul.u32 %s29, %s28
        %s280 = smul.u32 2, %s279
        %p281 = scmp.eq.s32.totalorder %s28, 0
        // Predicated region
        $region45: #{tpu_custom_call.1} parent=39 // pred_check
          %p282 = pneg %p281
        $region46: #{tpu_custom_call.1} parent=39 // pred_check_branch
          %284 = sbr.rel (%p282) target = $region48
        $region47: #{tpu_custom_call.1} parent=39 // pred_region
          %v285 = vld [vmem:[%s249] sm:$0xff]
          %v286 = vld [vmem:[%s249 + $0x8] sm:$0xff]
          %v287 = vld [vmem:[%s249 + $0x10] sm:$0xff]
          %v288 = vld [vmem:[%s249 + $0x18] sm:$0xff]
          %v289 = vld [vmem:[%s249 + $0x20] sm:$0xff]
          %v290 = vld [vmem:[%s249 + $0x28] sm:$0xff]
          %v291 = vld [vmem:[%s249 + $0x30] sm:$0xff]
          %v292 = vld [vmem:[%s249 + $0x38] sm:$0xff]
          %293 = vst [vmem:[#allocation2] sm:$0xff] %v285
          %294 = vst [vmem:[#allocation2 + $0x8] sm:$0xff] %v286
          %295 = vst [vmem:[#allocation2 + $0x10] sm:$0xff] %v287
          %296 = vst [vmem:[#allocation2 + $0x18] sm:$0xff] %v288
          %297 = vst [vmem:[#allocation2 + $0x20] sm:$0xff] %v289
          %298 = vst [vmem:[#allocation2 + $0x28] sm:$0xff] %v290
          %299 = vst [vmem:[#allocation2 + $0x30] sm:$0xff] %v291
          %300 = vst [vmem:[#allocation2 + $0x38] sm:$0xff] %v292
          %v301 = vadd.f32 %v285, %v286
          %v302 = vadd.f32 %v287, %v288
          %v303 = vadd.f32 %v289, %v290
          %v304 = vadd.f32 %v291, %v292
          %p305 = scmp.eq.s32.totalorder %s29, 0
          // Predicated region
          $region49: #{tpu_custom_call.1} parent=47 // pred_check
            %p306 = pneg %p305
          $region50: #{tpu_custom_call.1} parent=47 // pred_check_branch
            %308 = sbr.rel (%p306) target = $region52
          $region51: #{tpu_custom_call.1} parent=47 // pred_region
            %309 = vst [vmem:[#allocation3] sm:$0xff] %v301
            %310 = vst [vmem:[#allocation3 + $0x8] sm:$0xff] %v302
            %311 = vst [vmem:[#allocation3 + $0x10] sm:$0xff] %v303
            %312 = vst [vmem:[#allocation3 + $0x18] sm:$0xff] %v304
          $region52: #{tpu_custom_call.1} parent=47 // pred_fallthru
            _
          %p313 = scmp.gt.s32.totalorder %s29, 0
          // Predicated region
          $region53: #{tpu_custom_call.1} parent=47 // pred_check
            %p314 = pneg %p313
          $region54: #{tpu_custom_call.1} parent=47 // pred_check_branch
            %316 = sbr.rel (%p314) target = $region56
          $region55: #{tpu_custom_call.1} parent=47 // pred_region
            %v317 = vld [vmem:[#allocation3] sm:$0xff]
            %v318 = vld [vmem:[#allocation3 + $0x8] sm:$0xff]
            %v319 = vld [vmem:[#allocation3 + $0x10] sm:$0xff]
            %v320 = vld [vmem:[#allocation3 + $0x18] sm:$0xff]
            %v321 = vadd.f32 %v317, %v301
            %v322 = vadd.f32 %v318, %v302
            %v323 = vadd.f32 %v319, %v303
            %v324 = vadd.f32 %v320, %v304
            %325 = vst [vmem:[#allocation3] sm:$0xff] %v321
            %326 = vst [vmem:[#allocation3 + $0x8] sm:$0xff] %v322
            %327 = vst [vmem:[#allocation3 + $0x10] sm:$0xff] %v323
            %328 = vst [vmem:[#allocation3 + $0x18] sm:$0xff] %v324
          $region56: #{tpu_custom_call.1} parent=47 // pred_fallthru
            _
          // Predicated region
          $region57: #{tpu_custom_call.1} parent=47 // pred_check
            %p329 = pneg %p305
          $region58: #{tpu_custom_call.1} parent=47 // pred_check_branch
            %331 = sbr.rel (%p329) target = $region60
          $region59: #{tpu_custom_call.1} parent=47 // pred_region
            %v332 = vld [vmem:[#allocation3] sm:$0xff]
            %v333 = vld [vmem:[#allocation3 + $0x8] sm:$0xff]
            %v334 = vld [vmem:[#allocation3 + $0x10] sm:$0xff]
            %v335 = vld [vmem:[#allocation3 + $0x18] sm:$0xff]
            %336 = vadd.xlane.f32.xlu0 %v332
            %v337 = vpop.xlane.xlu0 %336
            %338 = vadd.xlane.f32.xlu0 %v333
            %v339 = vpop.xlane.xlu0 %338
            %340 = vadd.xlane.f32.xlu0 %v334
            %v341 = vpop.xlane.xlu0 %340
            %342 = vadd.xlane.f32.xlu0 %v335
            %v343 = vpop.xlane.xlu0 %342
            %v344 = vmul.f32 %v337, 0.00390625
            %v345 = vmul.f32 %v339, 0.00390625
            %v346 = vmul.f32 %v341, 0.00390625
            %v347 = vmul.f32 %v343, 0.00390625
            %v348 = vld [vmem:[%s1] sm:$0xff]
            %v349 = vld [vmem:[%s1 + $0x8] sm:$0xff]
            %v350 = vld [vmem:[%s1 + $0x10] sm:$0xff]
            %v351 = vld [vmem:[%s1 + $0x18] sm:$0xff]
            %v352 = vld [vmem:[%s2] sm:$0x1]
            %v353 = vld [vmem:[%s3] sm:$0xff]
            %v354 = vld [vmem:[%s3 + $0x8] sm:$0xff]
            %v355 = vld [vmem:[%s3 + $0x10] sm:$0xff]
            %v356 = vld [vmem:[%s3 + $0x18] sm:$0xff]
            %v357 = vld [vmem:[%s4] sm:$0xff]
            %v358 = vld [vmem:[%s4 + $0x8] sm:$0xff]
            %v359 = vld [vmem:[%s4 + $0x10] sm:$0xff]
            %v360 = vld [vmem:[%s4 + $0x18] sm:$0xff]
            %v361 = vmul.f32 %v348, %v344
            %v362 = vmul.f32 %v349, %v345
            %v363 = vmul.f32 %v350, %v346
            %v364 = vmul.f32 %v351, %v347
            %vm365 = vcmask 15360
            %v366 = vsel %vm365, %v361, 0.0
            %v367 = vsel %vm365, %v362, 0.0
            %v368 = vadd.f32 %v366, %v367
            %v369 = vsel %vm365, %v363, 0.0
            %v370 = vadd.f32 %v368, %v369
            %v371 = vsel %vm365, %v364, 0.0
            %v372 = vadd.f32 %v370, %v371
            %v373 = vrot.slane %v372, 4
            %v374 = vadd.f32 %v372, %v373
            %v375 = vrot.slane %v374, 2
            %v376 = vadd.f32 %v374, %v375
            %v377 = vrot.slane %v376, 1
            %v378 = vadd.f32 %v376, %v377
            %v379 = vadd.f32 %v378, %v352
            %v380 = vmax.f32 %v379, 0.0
            %v381 = vlaneseq
            %v382 = vshrl.u32 %v381, 7
            %v383 = vsub.s32 0, %v382
            %v384 = vrot.slane %v380, %v383
            %v385 = vmul.f32 %v353, %v384
            %v386 = vmul.f32 %v354, %v384
            %v387 = vmul.f32 %v355, %v384
            %v388 = vmul.f32 %v356, %v384
            %v389 = vsel %vm365, %v385, 0.0
            %390 = vadd.xlane.f32.xlu0 %v389
            %v391 = vpop.xlane.xlu0 %390
            %v392 = vsel %vm365, %v386, 0.0
            %393 = vadd.xlane.f32.xlu0 %v392
            %v394 = vpop.xlane.xlu0 %393
            %v395 = vsel %vm365, %v387, 0.0
            %396 = vadd.xlane.f32.xlu0 %v395
            %v397 = vpop.xlane.xlu0 %396
            %v398 = vsel %vm365, %v388, 0.0
            %399 = vadd.xlane.f32.xlu0 %v398
            %v400 = vpop.xlane.xlu0 %399
            %v401 = vadd.f32 %v391, %v357
            %v402 = vadd.f32 %v394, %v358
            %v403 = vadd.f32 %v397, %v359
            %v404 = vadd.f32 %v400, %v360
            %v405 = vxor.u32 %v401, 2147483648
            %v406 = vxor.u32 %v402, 2147483648
            %v407 = vxor.u32 %v403, 2147483648
            %v408 = vxor.u32 %v404, 2147483648
            %v409 = vmul.f32 %v405, 1.442695
            %v410 = vpow.pop %v409
            %v411 = vmul.f32 %v406, 1.442695
            %v412 = vpow.pop %v411
            %v413 = vmul.f32 %v407, 1.442695
            %v414 = vpow.pop %v413
            %v415 = vmul.f32 %v408, 1.442695
            %v416 = vpow.pop %v415
            %v417 = vadd.f32 %v410, 1.0
            %v418 = vadd.f32 %v412, 1.0
            %v419 = vadd.f32 %v414, 1.0
            %v420 = vadd.f32 %v416, 1.0
            %v421 = vrcp.pop %v417
            %v422 = vmul.f32 1.0, %v421
            %v423 = vrcp.pop %v418
            %v424 = vmul.f32 1.0, %v423
            %v425 = vrcp.pop %v419
            %v426 = vmul.f32 1.0, %v425
            %v427 = vrcp.pop %v420
            %v428 = vmul.f32 1.0, %v427
            %vm429 = vcmask 7168
            %430 = vst.msk [vmem:[#allocation4] sm:$0xff] %vm429, %v422
            %431 = vst.msk [vmem:[#allocation4 + $0x8] sm:$0xff] %vm429, %v424
            %432 = vst.msk [vmem:[#allocation4 + $0x10] sm:$0xff] %vm429, %v426
            %433 = vst.msk [vmem:[#allocation4 + $0x18] sm:$0xff] %vm429, %v428
          $region60: #{tpu_custom_call.1} parent=47 // pred_fallthru
            _
        $region48: #{tpu_custom_call.1} parent=39 // pred_fallthru
          _
        %p434 = scmp.eq.s32.totalorder %s28, 1
        // Predicated region
        $region61: #{tpu_custom_call.1} parent=39 // pred_check
          %p435 = pneg %p434
        $region62: #{tpu_custom_call.1} parent=39 // pred_check_branch
          %437 = sbr.rel (%p435) target = $region64
        $region63: #{tpu_custom_call.1} parent=39 // pred_region
          %v438 = vld [vmem:[#allocation2] sm:$0xff]
          %v439 = vld [vmem:[#allocation2 + $0x8] sm:$0xff]
          %v440 = vld [vmem:[#allocation2 + $0x10] sm:$0xff]
          %v441 = vld [vmem:[#allocation2 + $0x18] sm:$0xff]
          %v442 = vld [vmem:[#allocation2 + $0x20] sm:$0xff]
          %v443 = vld [vmem:[#allocation2 + $0x28] sm:$0xff]
          %v444 = vld [vmem:[#allocation2 + $0x30] sm:$0xff]
          %v445 = vld [vmem:[#allocation2 + $0x38] sm:$0xff]
          %v446 = vld [vmem:[#allocation4] sm:$0xff]
          %v447 = vld [vmem:[#allocation4 + $0x8] sm:$0xff]
          %v448 = vld [vmem:[#allocation4 + $0x10] sm:$0xff]
          %v449 = vld [vmem:[#allocation4 + $0x18] sm:$0xff]
          %451 = vset.pattern.permute.xlu0 0
          %452 = vperm.xlu0 %451, %v446
          %v453 = vpop.permute.xlu0 %452
          %456 = vset.pattern.permute.xlu0 0
          %457 = vperm.xlu0 %456, %v447
          %v458 = vpop.permute.xlu0 %457
          %461 = vset.pattern.permute.xlu0 0
          %462 = vperm.xlu0 %461, %v448
          %v463 = vpop.permute.xlu0 %462
          %466 = vset.pattern.permute.xlu0 0
          %467 = vperm.xlu0 %466, %v449
          %v468 = vpop.permute.xlu0 %467
          %v470 = vmul.f32 %v438, %v453
          %v471 = vmul.f32 %v439, %v453
          %v472 = vmul.f32 %v440, %v458
          %v473 = vmul.f32 %v441, %v458
          %v474 = vmul.f32 %v442, %v463
          %v475 = vmul.f32 %v443, %v463
          %v476 = vmul.f32 %v444, %v468
          %v477 = vmul.f32 %v445, %v468
          %478 = vst [vmem:[%s275] sm:$0xff] %v470
          %479 = vst [vmem:[%s275 + $0x8] sm:$0xff] %v471
          %480 = vst [vmem:[%s275 + $0x10] sm:$0xff] %v472
          %481 = vst [vmem:[%s275 + $0x18] sm:$0xff] %v473
          %482 = vst [vmem:[%s275 + $0x20] sm:$0xff] %v474
          %483 = vst [vmem:[%s275 + $0x28] sm:$0xff] %v475
          %484 = vst [vmem:[%s275 + $0x30] sm:$0xff] %v476
          %485 = vst [vmem:[%s275 + $0x38] sm:$0xff] %v477
        $region64: #{tpu_custom_call.1} parent=39 // pred_fallthru
          _
        %s486 = sand.u32 %s169, 1
        %s487 = scalar_lea.sflag [#allocation7], %s486
        %s488 = sand.u32 %s169, 1
        %s489 = smul.addr %s488, 64
        %s490 = scalar_lea.vmem [#allocation8], %s489
        // Predicated region
        $region65: #{tpu_custom_call.1} parent=39 // pred_check
          %p491 = pneg %p179
        $region66: #{tpu_custom_call.1} parent=39 // pred_check_branch
          %493 = sbr.rel (%p491) target = $region68
        $region67: #{tpu_custom_call.1} parent=39 // pred_region
          %s494 = smul.u32 %s29, %s28
          %s495 = smul.u32 2, %s494
          %s497 = ssub.s32 1024, 1024
          %498 = vsyncadd %s487, %s497
          %s499 = smul.addr %s27, 8
          %s500 = sadd.s32 %s495, %s499
          %s501 = smul.addr %s500, 128
          %s502 = scalar_lea.hbm %s5, %s501
          %s503 = sshll.u32 %s490, 4
          %s504 = int_to_ptr.vmem [resolvable:$true] %s503
          %509 = dma.vmem_to_hbm [thread:$0]  %s504, 1024, %s502, %s487, 256, 256, 16
        $region68: #{tpu_custom_call.1} parent=39 // pred_fallthru
          _
      $region40: #{tpu_custom_call.1} parent=5 // pred_fallthru
        _
      %p510 = scmp.le.s32.totalorder 2, %s17
      // Predicated region
      $region69: #{tpu_custom_call.1} parent=5 // pred_check
        %p511 = pneg %p510
      $region70: #{tpu_custom_call.1} parent=5 // pred_check_branch
        %513 = sbr.rel (%p511) target = $region72
      $region71: #{tpu_custom_call.1} parent=5 // pred_region
        %s514 = ssub.s32 %s17, 2
        // Predicated region
        $region73: #{tpu_custom_call.1} parent=71 // pred_check
          %p515 = pneg %p185
        $region74: #{tpu_custom_call.1} parent=71 // pred_check_branch
          %517 = sbr.rel (%p515) target = $region76
        $region75: #{tpu_custom_call.1} parent=71 // pred_region
          %s518 = sand.u32 %s170, 1
          %s519 = scalar_lea.sflag [#allocation7], %s518
          %s520 = sand.u32 %s170, 1
          %s521 = smul.addr %s520, 64
          %s522 = scalar_lea.vmem [#allocation8], %s521
          %523 = dma.done %s519, 1024
        $region76: #{tpu_custom_call.1} parent=71 // pred_fallthru
          _
      $region72: #{tpu_custom_call.1} parent=5 // pred_fallthru
        _
    $region6: #{tpu_custom_call.1} parent=1 // loop_footer
      %s21 = sadd.s32 1, %s17
    $region7: #{tpu_custom_call.1} parent=1 // loop_footer_branch
      %16 = sbr.rel target = $region3
    $region8: #{tpu_custom_call.1} parent=1 // loop_exit
      _
    %524 = vsyncpa [#allocation6], 1
    %s525 = scalar_lea.sflag [#allocation6], 1
    %526 = vsyncpa %s525, 1
    %527 = vsyncpa [#allocation7], 1
    %s528 = scalar_lea.sflag [#allocation7], 1
    %529 = vsyncpa %s528, 1

</llo_original>
